<compile_context>
chip_gen: v7x
topology: tpu7x:2x2x1
jax: 0.10.0
libtpu: 0.0.40
codegen_flags: <defaults>
</compile_context>

<pallas_src>
import functools

import jax
import jax.numpy as jnp
from jax import lax
from jax.experimental import pallas as pl
from jax.experimental.pallas import tpu as pltpu

# Model hyperparameters (mirroring the PyTorch script; vocab comes from `chars`,
# we pick a deterministic synthetic vocab size).
BLOCK_SIZE = 8      # block_size
N_EMBD = 32         # n_embd
VOCAB_SIZE = 65     # vocab_size (synthetic, e.g. tiny-shakespeare char vocab)
VOCAB_PAD = 128     # vocab padded to one full lane width (MXU / vst friendly)


def _logits_from_onehot(idx_ref, fused_ref, posb_ref):
    """logits = onehot(idx) @ fused_tok_logits + tile(pos_logits_b).

    idx_ref   : (BT, 1)      int32
    fused_ref : (Vpad, Vpad) f32   row i = tok_table[i] @ W.T (cols >= vocab are 0)
    posb_ref  : (T, Vpad)    f32   pos_table @ W.T + b       (cols >= vocab are 0)
    returns (logits (BT, Vpad) f32, lane_iota (BT, Vpad) int32)
    """
    bt = idx_ref.shape[0]
    vpad = fused_ref.shape[1]
    t = posb_ref.shape[0]

    idx = idx_ref[...]                                              # (BT, 1)
    lane_iota = lax.broadcasted_iota(jnp.int32, (bt, vpad), 1)      # lane-dir iota
    onehot = (lane_iota == idx).astype(jnp.float32)                 # (BT, Vpad), dense

    # Exact row gather as one fully-dense (BT,128)x(128,128) MXU matmul.
    logits = jnp.dot(onehot, fused_ref[...],
                     preferred_element_type=jnp.float32)            # (BT, Vpad)
    # Flattened row r uses position r % T, so tiling the (T, Vpad) table B times
    # along the sublane axis lines up exactly with the row-major flatten.
    logits = logits + jnp.tile(posb_ref[...], (bt // t, 1))
    return logits, lane_iota


def _bigram_logits_kernel(idx_ref, fused_ref, posb_ref, out_ref):
    """Inference path: logits only."""
    logits, _ = _logits_from_onehot(idx_ref, fused_ref, posb_ref)
    out_ref[...] = logits


def _bigram_logits_loss_kernel(idx_ref, tgt_ref, fused_ref, posb_ref,
                               out_ref, loss_ref, *, vocab):
    """Training path: logits + fused mean cross-entropy (scalar to SMEM)."""
    logits, lane_iota = _logits_from_onehot(idx_ref, fused_ref, posb_ref)
    out_ref[...] = logits

    bt = logits.shape[0]
    # Padded vocab lanes hold exactly 0.0; mask them hard-negative before the
    # softmax reduction so they cannot corrupt logsumexp.
    masked = jnp.where(lane_iota < vocab, logits, jnp.float32(-1e30))
    m = jnp.max(masked, axis=-1, keepdims=True)                     # (BT, 1)
    logz = m + jnp.log(jnp.sum(jnp.exp(masked - m),
                               axis=-1, keepdims=True))             # (BT, 1)
    tgt = tgt_ref[...]                                              # (BT, 1)
    picked = jnp.sum(jnp.where(lane_iota == tgt, logits, 0.0),
                     axis=-1, keepdims=True)                        # (BT, 1)
    loss_ref[0, 0] = jnp.sum(logz - picked) / bt


def prepare_params(params):
    """One-time (outside the hot path) padding + matmul fusion.

    fused_tok_logits[i] = tok_table[i] @ W.T   (vocab padded to 128, zeros beyond)
    pos_logits_b[p]     = pos_table[p] @ W.T + b
    """
    tok_table, pos_table, w, b = (params["tok_table"], params["pos_table"],
                                  params["w"], params["b"])
    v, _ = tok_table.shape
    pad = VOCAB_PAD - v
    tok_p = jnp.pad(tok_table, ((0, pad), (0, 0)))                  # (Vpad, E)
    w_p = jnp.pad(w, ((0, pad), (0, 0)))                            # (Vpad, E)
    b_p = jnp.pad(b, (0, pad))                                      # (Vpad,)
    hi = jax.lax.Precision.HIGHEST                                  # exact f32 tables
    fused_tok_logits = jnp.dot(tok_p, w_p.T, precision=hi)          # (Vpad, Vpad)
    pos_logits_b = jnp.dot(pos_table, w_p.T, precision=hi) + b_p[None, :]  # (T, Vpad)
    return {
        "fused_tok_logits": fused_tok_logits,
        "pos_logits_b": pos_logits_b,
        "vocab_size": v,
    }


def bigram_forward(idx, prepped, targets=None):
    """JAX wrapper matching BigramLanguageModel.forward(idx, targets).

    idx: (B, T) int32 with T <= block_size.
    Returns (logits (B, T, vocab_size) float32, loss or None).
    """
    B, T = idx.shape
    assert T <= BLOCK_SIZE, "T must be <= block_size"
    V = prepped["vocab_size"]
    BT = B * T

    idx_col = idx.reshape(BT, 1).astype(jnp.int32)
    posb = prepped["pos_logits_b"][:T]                   # works for T < block_size
    vmem = functools.partial(pl.BlockSpec, memory_space=pltpu.MemorySpace.VMEM)
    smem = functools.partial(pl.BlockSpec, memory_space=pltpu.MemorySpace.SMEM)

    # TODO(synk): when B*T grows to hundreds+ rows, add a 1-D "parallel" grid over
    # the BT axis (tile idx/targets/out only; the 64 KiB fused table stays resident
    # via a constant index_map) so v7x's second TensorCore is used and the HBM
    # traffic pipelines; bf16 fused table is the next lever once MXU-throughput-bound.

    if targets is None:
        logits_pad = pl.pallas_call(
            _bigram_logits_kernel,
            out_shape=jax.ShapeDtypeStruct((BT, VOCAB_PAD), jnp.float32),
            in_specs=[vmem(), vmem(), vmem()],
            out_specs=vmem(),
        )(idx_col, prepped["fused_tok_logits"], posb)
        logits = logits_pad[:, :V].reshape(B, T, V)
        return logits, None

    tgt_col = targets.reshape(BT, 1).astype(jnp.int32)
    logits_pad, loss = pl.pallas_call(
        functools.partial(_bigram_logits_loss_kernel, vocab=V),
        out_shape=(jax.ShapeDtypeStruct((BT, VOCAB_PAD), jnp.float32),
                   jax.ShapeDtypeStruct((1, 1), jnp.float32)),
        in_specs=[vmem(), vmem(), vmem(), vmem()],
        out_specs=(vmem(), smem()),
    )(idx_col, tgt_col, prepped["fused_tok_logits"], posb)
    logits = logits_pad[:, :V].reshape(B, T, V)
    return logits, loss[0, 0]


def init_params(key):
    """Deterministic parameter init (shapes from the module's __init__)."""
    k1, k2, k3, k4 = jax.random.split(key, 4)
    tok_table = jax.random.normal(k1, (VOCAB_SIZE, N_EMBD), jnp.float32)      # nn.Embedding
    pos_table = jax.random.normal(k2, (BLOCK_SIZE, N_EMBD), jnp.float32)      # nn.Embedding
    bound = 1.0 / (N_EMBD ** 0.5)
    w = jax.random.uniform(k3, (VOCAB_SIZE, N_EMBD), jnp.float32, -bound, bound)  # nn.Linear.weight
    b = jax.random.uniform(k4, (VOCAB_SIZE,), jnp.float32, -bound, bound)         # nn.Linear.bias
    return {"tok_table": tok_table, "pos_table": pos_table, "w": w, "b": b}


def _reference_forward(idx, params, targets=None):
    """Pure-JAX reference for correctness checking (full-f32 matmul like PyTorch)."""
    tok_emb = params["tok_table"][idx]                         # (B, T, E)
    pos_emb = params["pos_table"][jnp.arange(idx.shape[1])]    # (T, E)
    x = tok_emb + pos_emb
    logits = jnp.dot(x, params["w"].T,
                     precision=jax.lax.Precision.HIGHEST) + params["b"]
    if targets is None:
        return logits, None
    B, T, C = logits.shape
    lf = logits.reshape(B * T, C)
    tf = targets.reshape(B * T)
    loss = jnp.mean(jax.nn.logsumexp(lf, -1)
                    - jnp.take_along_axis(lf, tf[:, None], -1)[:, 0])
    return logits, loss


if __name__ == "__main__":
    key = jax.random.PRNGKey(0)
    pkey, ikey, tkey = jax.random.split(key, 3)

    params = init_params(pkey)
    prepped = prepare_params(params)   # one-time padding + matmul fusion, off the hot path

    B, T = 2, BLOCK_SIZE
    idx = jax.random.randint(ikey, (B, T), 0, VOCAB_SIZE, dtype=jnp.int32)
    targets = jax.random.randint(tkey, (B, T), 0, VOCAB_SIZE, dtype=jnp.int32)

    # targets=None path
    logits, loss = bigram_forward(idx, prepped, targets=None)
    logits = jax.block_until_ready(logits)
    assert logits.shape == (B, T, VOCAB_SIZE) and loss is None

    # targets path (fused in-kernel cross-entropy)
    logits_t, loss_t = bigram_forward(idx, prepped, targets=targets)
    loss_t = jax.block_until_ready(loss_t)

    # correctness vs pure-JAX reference
    ref_logits, ref_loss = _reference_forward(idx, params, targets=targets)
    assert jnp.allclose(logits, ref_logits, atol=1e-4, rtol=1e-4)
    assert jnp.allclose(logits_t, ref_logits, atol=1e-4, rtol=1e-4)
    assert jnp.allclose(loss_t, ref_loss, atol=1e-4, rtol=1e-4)

    print("KERNEL_OK")
</pallas_src>

<mosaic_0001>
module attributes {stable_mosaic.version = 11 : i64} {
  func.func @_bigram_logits_kernel(%arg0: memref<16x1xi32, #tpu.memory_space<vmem>>, %arg1: memref<128x128xf32, #tpu.memory_space<vmem>>, %arg2: memref<8x128xf32, #tpu.memory_space<vmem>>, %arg3: memref<16x128xf32, #tpu.memory_space<vmem>>) attributes {dimension_semantics = [], scalar_prefetch = 0 : i64, scratch_operands = 0 : i64, tpu.core_type = #tpu.core_type<tc>} {
    %c0 = arith.constant 0 : index
    %c0_0 = arith.constant 0 : index
    %0 = vector.load %arg0[%c0, %c0_0] : memref<16x1xi32, #tpu.memory_space<vmem>>, vector<16x1xi32>
    %1 = tpu.iota {dimensions = array<i32: 1>} : vector<16x128xi32>
    %2 = vector.broadcast %0 : vector<16x1xi32> to vector<16x128xi32>
    %3 = arith.cmpi eq, %1, %2 : vector<16x128xi32>
    %4 = arith.extui %3 : vector<16x128xi1> to vector<16x128xi32>
    %5 = arith.sitofp %4 : vector<16x128xi32> to vector<16x128xf32>
    %c0_1 = arith.constant 0 : index
    %c0_2 = arith.constant 0 : index
    %6 = vector.load %arg1[%c0_1, %c0_2] : memref<128x128xf32, #tpu.memory_space<vmem>>, vector<128x128xf32>
    %cst = arith.constant dense<0.000000e+00> : vector<16x128xf32>
    %7 = tpu.matmul %5, %6, %cst {dimension_numbers = #tpu.dot_dimension_numbers<[1], [0], [0], [1], [0, 0, 1, 1], [], []>} : vector<16x128xf32>, vector<128x128xf32>, vector<16x128xf32> -> vector<16x128xf32>
    %c0_3 = arith.constant 0 : index
    %c0_4 = arith.constant 0 : index
    %8 = vector.load %arg2[%c0_3, %c0_4] : memref<8x128xf32, #tpu.memory_space<vmem>>, vector<8x128xf32>
    %9 = tpu.concatenate %8, %8 in 0 : vector<8x128xf32>, vector<8x128xf32> -> vector<16x128xf32>
    %10 = arith.addf %7, %9 : vector<16x128xf32>
    %c0_5 = arith.constant 0 : index
    %c0_6 = arith.constant 0 : index
    %11 = vector.load %arg3[%c0_5, %c0_6] : memref<16x128xf32, #tpu.memory_space<vmem>>, vector<16x128xf32>
    tpu.vector_store %arg3[%c0_5, %c0_6], %10 {strides = array<i32>} : memref<16x128xf32, #tpu.memory_space<vmem>>, vector<16x128xf32>,
    return
  }
}

</mosaic_0001>

<llo_original>
// kernel: tpu_custom_call.1
$region0: #{tpu_custom_call.1}
  #allocation0 [shape = 'u32[]', space=smem, size = 0x4, offset = 0x4, fixed_abs, tag = 'smem constant byte address 0x4 - core index']
  #allocation1 [shape = 'u32[144,128]{1,0:T(1,128)}', space=vmem, size = 0x12000, scoped, tag = 'internal scratch']
  %s0 = inlined_call_operand.vmem [shape: s32[16,1], index: 0, kind: input, shape index: {}]
  %s1 = inlined_call_operand.hbm [shape: f32[128,128], index: 1, kind: input, shape index: {}]
  %s2 = inlined_call_operand.vmem [shape: f32[8,128], index: 2, kind: input, shape index: {}]
  %s3 = inlined_call_operand.hbm [shape: f32[16,128], index: 3, kind: output, shape index: {}]
  %s4 = sld [smem:[#allocation0]]
  $region26: #{tpu_custom_call.1} parent=0
    _
  %s6 = ssub.s32 1, %s4
  %s7 = scalar_select 0, %s6, %s4
  $region1: #{tpu_custom_call.1} parent=0
    #allocation2 [shape = 'u8[65536]{0}', space=vmem, size = 0x10000, scoped, tag = 'input window, operand 1, single buffered']
    #allocation3 [shape = 's32[1]{0}', space=sflag, size = 0x4, scoped, tag = 'scoped memory for tpu_custom_call.1']
    #allocation4 [shape = 's32[1]{0}', space=sflag, size = 0x4, scoped, tag = 'scoped memory for tpu_custom_call.1']
    #allocation5 [shape = 'u8[8192]{0}', space=vmem, size = 0x2000, scoped, tag = 'output window, operand 0, single buffered']
    %8 = vsyncpa [#allocation3], 0
    %9 = vsyncpa [#allocation4], 0
    // Predicated region
    $region2: #{tpu_custom_call.1} parent=1 // pred_check
      _
    $region3: #{tpu_custom_call.1} parent=1 // pred_check_branch
      %11 = sbr.rel (0) target = $region5
    $region4: #{tpu_custom_call.1} parent=1 // pred_region
      _
    $region5: #{tpu_custom_call.1} parent=1 // pred_fallthru
      _
    // Predicated region
    $region6: #{tpu_custom_call.1} parent=1 // pred_check
      _
    $region7: #{tpu_custom_call.1} parent=1 // pred_check_branch
      %13 = sbr.rel (0) target = $region9
    $region8: #{tpu_custom_call.1} parent=1 // pred_region
      %s15 = ssub.s32 2048, 2048
      %16 = vsyncadd [#allocation3], %s15
      %s17 = sshll.u32 [#allocation2], 4
      %s18 = int_to_ptr.vmem [resolvable:$true] %s17
      %23 = dma.hbm_to_vmem [thread:$0]  %s1, 2048, %s18, [#allocation3], 128, 128, 8
    $region9: #{tpu_custom_call.1} parent=1 // pred_fallthru
      _
    // Predicated region
    $region10: #{tpu_custom_call.1} parent=1 // pred_check
      _
    $region11: #{tpu_custom_call.1} parent=1 // pred_check_branch
      %25 = sbr.rel (0) target = $region13
    $region12: #{tpu_custom_call.1} parent=1 // pred_region
      _
    $region13: #{tpu_custom_call.1} parent=1 // pred_fallthru
      _
    // Predicated region
    $region14: #{tpu_custom_call.1} parent=1 // pred_check
      _
    $region15: #{tpu_custom_call.1} parent=1 // pred_check_branch
      %27 = sbr.rel (0) target = $region17
    $region16: #{tpu_custom_call.1} parent=1 // pred_region
      %28 = dma.done [#allocation3], 2048
    $region17: #{tpu_custom_call.1} parent=1 // pred_fallthru
      _
    %v29 = vld [vmem:[%s0] sm:$0xff]
    %v30 = vld [vmem:[%s0 + $0x8] sm:$0xff]
    %v31 = vlaneseq
    %v32 = vand.u32 %v31, 127
    %33 = vset.pattern.permute.xlu0 0
    %34 = vperm.xlu0 %33, %v29
    %v35 = vpop.permute.xlu0 %34
    %36 = vset.pattern.permute.xlu0 0
    %37 = vperm.xlu0 %36, %v30
    %v38 = vpop.permute.xlu0 %37
    %vm39 = vcmp.eq.s32.totalorder %v32, %v35
    %vm40 = vcmp.eq.s32.totalorder %v32, %v38
    %v41 = vsel %vm39, 1, 0
    %v42 = vsel %vm40, 1, 0
    %v43 = vcvt.s32.f32 %v41
    %v44 = vcvt.s32.f32 %v42
    %v45 = vld [vmem:[#allocation2] sm:$0xff]
    %v46 = vld [vmem:[#allocation2 + $0x8] sm:$0xff]
    %v47 = vld [vmem:[#allocation2 + $0x10] sm:$0xff]
    %v48 = vld [vmem:[#allocation2 + $0x18] sm:$0xff]
    %v49 = vld [vmem:[#allocation2 + $0x20] sm:$0xff]
    %v50 = vld [vmem:[#allocation2 + $0x28] sm:$0xff]
    %v51 = vld [vmem:[#allocation2 + $0x30] sm:$0xff]
    %v52 = vld [vmem:[#allocation2 + $0x38] sm:$0xff]
    %v53 = vld [vmem:[#allocation2 + $0x40] sm:$0xff]
    %v54 = vld [vmem:[#allocation2 + $0x48] sm:$0xff]
    %v55 = vld [vmem:[#allocation2 + $0x50] sm:$0xff]
    %v56 = vld [vmem:[#allocation2 + $0x58] sm:$0xff]
    %v57 = vld [vmem:[#allocation2 + $0x60] sm:$0xff]
    %v58 = vld [vmem:[#allocation2 + $0x68] sm:$0xff]
    %v59 = vld [vmem:[#allocation2 + $0x70] sm:$0xff]
    %v60 = vld [vmem:[#allocation2 + $0x78] sm:$0xff]
    %v61 = vld [vmem:[%s2] sm:$0xff]
    %62 = vmatprep.subr.mxu0 0.0
    %63 = vmatpush1.msra.mxu0 %v45
    %64 = vmatprep.subr.mxu0 0.0
    %65 = vmatpush1.msra.mxu0 %v46
    %66 = vmatprep.subr.mxu0 0.0
    %67 = vmatpush1.msra.mxu0 %v47
    %68 = vmatprep.subr.mxu0 0.0
    %69 = vmatpush1.msra.mxu0 %v48
    %70 = vmatprep.subr.mxu0 0.0
    %71 = vmatpush1.msra.mxu0 %v49
    %72 = vmatprep.subr.mxu0 0.0
    %73 = vmatpush1.msra.mxu0 %v50
    %74 = vmatprep.subr.mxu0 0.0
    %75 = vmatpush1.msra.mxu0 %v51
    %76 = vmatprep.subr.mxu0 0.0
    %77 = vmatpush1.msra.mxu0 %v52
    %78 = vmatprep.subr.mxu0 0.0
    %79 = vmatpush1.msra.mxu0 %v53
    %80 = vmatprep.subr.mxu0 0.0
    %81 = vmatpush1.msra.mxu0 %v54
    %82 = vmatprep.subr.mxu0 0.0
    %83 = vmatpush1.msra.mxu0 %v55
    %84 = vmatprep.subr.mxu0 0.0
    %85 = vmatpush1.msra.mxu0 %v56
    %86 = vmatprep.subr.mxu0 0.0
    %87 = vmatpush1.msra.mxu0 %v57
    %88 = vmatprep.subr.mxu0 0.0
    %89 = vmatpush1.msra.mxu0 %v58
    %90 = vmatprep.subr.mxu0 0.0
    %91 = vmatpush1.msra.mxu0 %v59
    %92 = vmatprep.subr.mxu0 0.0
    %93 = vmatpush1.msra.mxu0 %v60
    %94 = vmatprep.subr.mxu0 0.0
    %95 = vmatpush1.msra.mxu0 0.0
    %96 = vmatprep.subr.mxu0 0.0
    %97 = vmatpush1.msra.mxu0 0.0
    %98 = vmatprep.subr.mxu0 0.0
    %99 = vmatpush1.msra.mxu0 0.0
    %100 = vmatprep.subr.mxu0 0.0
    %101 = vmatpush1.msra.mxu0 0.0
    %102 = vmatprep.subr.mxu0 0.0
    %103 = vmatpush1.msra.mxu0 0.0
    %104 = vmatprep.subr.mxu0 0.0
    %105 = vmatpush1.msra.mxu0 0.0
    %106 = vmatprep.subr.mxu0 0.0
    %107 = vmatpush1.msra.mxu0 0.0
    %108 = vmatprep.subr.mxu0 0.0
    %109 = vmatpush1.msra.mxu0 0.0
    %110 = vmatprep.subr.mxu0 0.0
    %111 = vmatpush1.msra.mxu0 0.0
    %112 = vmatprep.subr.mxu0 0.0
    %113 = vmatpush1.msra.mxu0 0.0
    %114 = vmatprep.subr.mxu0 0.0
    %115 = vmatpush1.msra.mxu0 0.0
    %116 = vmatprep.subr.mxu0 0.0
    %117 = vmatpush1.msra.mxu0 0.0
    %118 = vmatprep.subr.mxu0 0.0
    %119 = vmatpush1.msra.mxu0 0.0
    %120 = vmatprep.subr.mxu0 0.0
    %121 = vmatpush1.msra.mxu0 0.0
    %122 = vmatprep.subr.mxu0 0.0
    %123 = vmatpush1.msra.mxu0 0.0
    %124 = vmatprep.subr.mxu0 0.0
    %125 = vmatpush1.msra.mxu0 0.0
    %126 = vmatprep.mubr.f32.mxu0 0.0
    %127 = vmatmul.mubr.f32.gmra.mrb[0].mxu0 %v43
    %v128 = vpop.f32.mrb[0].mxu0
    %v129 = vadd.f32 %v61, %v128
    %v130 = vpop.f32.mrb[0].mxu0
    %131 = vmatprep.mubr.f32.mxu0 0.0
    %132 = vmatmul.mubr.f32.gmra.mrb[0].mxu0 %v44
    %v133 = vpop.f32.mrb[0].mxu0
    %v134 = vadd.f32 %v61, %v133
    %v135 = vpop.f32.mrb[0].mxu0
    %136 = vdwg.mxu0
    %137 = vst [vmem:[#allocation5] sm:$0xff] %v129
    %138 = vst [vmem:[#allocation5 + $0x8] sm:$0xff] %v134
    // Predicated region
    $region18: #{tpu_custom_call.1} parent=1 // pred_check
      _
    $region19: #{tpu_custom_call.1} parent=1 // pred_check_branch
      %140 = sbr.rel (0) target = $region21
    $region20: #{tpu_custom_call.1} parent=1 // pred_region
      %s142 = ssub.s32 256, 256
      %143 = vsyncadd [#allocation4], %s142
      %s144 = sshll.u32 [#allocation5], 4
      %s145 = int_to_ptr.vmem [resolvable:$true] %s144
      %150 = dma.vmem_to_hbm [thread:$0]  %s145, 256, %s3, [#allocation4], 128, 128, 8
    $region21: #{tpu_custom_call.1} parent=1 // pred_fallthru
      _
    // Predicated region
    $region22: #{tpu_custom_call.1} parent=1 // pred_check
      _
    $region23: #{tpu_custom_call.1} parent=1 // pred_check_branch
      %152 = sbr.rel (0) target = $region25
    $region24: #{tpu_custom_call.1} parent=1 // pred_region
      %153 = dma.done [#allocation4], 256
    $region25: #{tpu_custom_call.1} parent=1 // pred_fallthru
      _
    %154 = vsyncpa [#allocation3], 1
    %155 = vsyncpa [#allocation4], 1

</llo_original>
